<compile_context>
chip_gen: v6e
topology: v6e:2x2x1
jax: 0.10.0
libtpu: 0.0.40
codegen_flags: <defaults>
</compile_context>

<pallas_src>
import functools

import jax
import jax.numpy as jnp
from jax import lax
from jax.experimental import pallas as pl
from jax.experimental.pallas import tpu as pltpu


def _round_up(x: int, m: int) -> int:
    return ((x + m - 1) // m) * m


def _default_tile_and_vmem():
    """Generation-aware (tile_b, vmem_limit_bytes)."""
    try:
        vmem_bytes = pltpu.get_tpu_info().vmem_capacity_bytes
    except Exception:
        vmem_bytes = 64 << 20          # assume the smallest (v7x per-TC) budget
    if vmem_bytes >= (96 << 20):       # v5e / v6e: 128 MiB physical VMEM
        return 65536, 100 << 20
    return 32768, 48 << 20             # v7x: 64 MiB per TensorCore


def _choose_tile(batch: int, tile_b):
    default_tb, vmem_limit = _default_tile_and_vmem()
    if tile_b is None:
        tile_b = default_tb
    tile_b = _round_up(max(int(tile_b), 128), 128)            # lane-aligned (128)
    # Keep >=2 grid steps when the batch allows it: lets v7x's two TensorCores
    # split the "parallel" axis and gives the pipeline something to overlap.
    tb = min(tile_b, _round_up(pl.cdiv(batch, 2), 128))
    return max(tb, 128), vmem_limit


def _mlp_kernel(x_ref, w1_ref, b1_ref, w2_ref, b2_ref, o_ref):
    # x_ref : (in, TB)  f32   -- batch on the lane axis
    # w1_ref: (64, in)  bf16  (VMEM-resident across grid steps)
    # b1_ref: (64, 1)   f32
    # w2_ref: (64, out) f32
    # b2_ref: (out, 1)  f32
    # o_ref : (out, TB) f32
    x_bf = x_ref[...].astype(jnp.bfloat16)                    # cheap per-tile VPU cast
    h = jnp.dot(w1_ref[...], x_bf,
                preferred_element_type=jnp.float32)            # single-pass bf16 MXU, f32 acc
    h = jnp.maximum(h + b1_ref[...], 0.0)                      # bias + ReLU on the VPU
    # TODO(synk): folding b1/b2 into the matmuls (ones-row trick) deliberately
    # skipped; small win relative to the structural changes above.
    if o_ref.shape[0] == 1:
        # out_shape == 1 (module default): VPU multiply + sublane (XLU) reduce.
        # Avoids latching the TB-wide hidden into the MXU weight registers.
        out = jnp.sum(h * w2_ref[...], axis=0, keepdims=True)          # (1, TB)
    else:
        # General out_shape: contract the 64-dim on the MXU.
        out = lax.dot_general(w2_ref[...].astype(jnp.bfloat16),
                              h.astype(jnp.bfloat16),
                              (((0,), (0,)), ((), ())),
                              preferred_element_type=jnp.float32)       # (out, TB)
    o_ref[...] = (out + b2_ref[...]).astype(o_ref.dtype)


@functools.partial(jax.jit, static_argnames=("tile_b", "vmem_limit"))
def _pallas_forward_fm(x_fm, w1_t, b1_c, w2_c, b2_c, *, tile_b, vmem_limit):
    in_shape, batch = x_fm.shape
    dim_h = w1_t.shape[0]
    out_shape = w2_c.shape[1]
    tb = tile_b
    grid = (pl.cdiv(batch, tb),)        # partial last block handled by Pallas (masked writes)

    return pl.pallas_call(
        _mlp_kernel,
        out_shape=jax.ShapeDtypeStruct((out_shape, batch), jnp.float32),
        grid=grid,
        in_specs=[
            # Streamed x tiles: default double-buffering is enough for multi-MB tiles.
            pl.BlockSpec((in_shape, tb), lambda i: (0, i)),
            # Weights / biases: constant index_map -> VMEM-resident, no re-DMA per step.
            pl.BlockSpec((dim_h, in_shape), lambda i: (0, 0)),
            pl.BlockSpec((dim_h, 1), lambda i: (0, 0)),
            pl.BlockSpec((dim_h, out_shape), lambda i: (0, 0)),
            pl.BlockSpec((out_shape, 1), lambda i: (0, 0)),
        ],
        out_specs=pl.BlockSpec((out_shape, tb), lambda i: (0, i)),
        compiler_params=pltpu.CompilerParams(
            dimension_semantics=("parallel",),     # batch tiles are independent
            vmem_limit_bytes=vmem_limit,
        ),
    )(x_fm, w1_t, b1_c, w2_c, b2_c)


def deep_reg_forward_fm(x_fm, w1, b1, w2, b2, *, tile_b=None):
    """Pallas forward, feature-major input (no transpose pass over x).

    x_fm: (in_shape, B); w1: (in_shape, 64); b1: (64,); w2: (64, out); b2: (out,)
    Returns torch.squeeze(relu(x @ w1 + b1) @ w2 + b2).
    """
    in_shape, batch = x_fm.shape
    dim_h = w1.shape[1]
    out_shape = w2.shape[1]
    tb, vmem_limit = _choose_tile(batch, tile_b)

    w1_t = jnp.asarray(w1, jnp.float32).T.astype(jnp.bfloat16)        # (64, in), tiny one-time
    b1_c = jnp.reshape(jnp.asarray(b1, jnp.float32), (dim_h, 1))
    w2_c = jnp.reshape(jnp.asarray(w2, jnp.float32), (dim_h, out_shape))
    b2_c = jnp.reshape(jnp.asarray(b2, jnp.float32), (out_shape, 1))

    y_t = _pallas_forward_fm(jnp.asarray(x_fm, jnp.float32), w1_t, b1_c, w2_c, b2_c,
                             tile_b=tb, vmem_limit=vmem_limit)
    # (out, B) -> (B, out) -> torch.squeeze semantics (drops ALL size-1 dims).
    return jnp.squeeze(y_t.T)


def _xla_forward(x, w1, b1, w2, b2):
    return jnp.squeeze(jnp.maximum(x @ w1 + b1[None, :], 0.0) @ w2 + b2[None, :])


def deep_reg_forward(x, w1, b1, w2, b2, *, tile_b=None, min_pallas_batch=2048):
    """Pallas forward matching DeepRegModel: x is (B, in_shape), row-major."""
    batch = x.shape[0]
    if batch < min_pallas_batch:
        # Small-batch fast path: transpose + kernel launch overhead exceeds the
        # whole computation; XLA's fused dot is strictly faster here.
        return _xla_forward(x, w1, b1, w2, b2)
    # TODO(synk): x.T materializes one extra HBM pass over x; callers that can
    # produce feature-major activations should use deep_reg_forward_fm directly.
    return deep_reg_forward_fm(x.T, w1, b1, w2, b2, tile_b=tile_b)


def init_params(key, in_shape: int = 1, dim_h: int = 64, out_shape: int = 1):
    """Deterministic synthetic parameter init (uniform, PyTorch-Linear-like bounds)."""
    k1, k2, k3, k4 = jax.random.split(key, 4)
    bound1 = 1.0 / jnp.sqrt(jnp.float32(in_shape))
    bound2 = 1.0 / jnp.sqrt(jnp.float32(dim_h))
    w1 = jax.random.uniform(k1, (in_shape, dim_h), jnp.float32, -bound1, bound1)
    b1 = jax.random.uniform(k2, (dim_h,), jnp.float32, -bound1, bound1)
    w2 = jax.random.uniform(k3, (dim_h, out_shape), jnp.float32, -bound2, bound2)
    b2 = jax.random.uniform(k4, (out_shape,), jnp.float32, -bound2, bound2)
    return w1, b1, w2, b2


if __name__ == "__main__":
    key = jax.random.PRNGKey(0)
    k_x, k_p, k_x2, k_x3 = jax.random.split(key, 4)

    B, IN, OUT = 8, 4, 1
    w1, b1, w2, b2 = init_params(k_p, in_shape=IN, out_shape=OUT)

    # 1) Small batch through the public wrapper (XLA fast path).
    x = jax.random.normal(k_x, (B, IN), jnp.float32)
    out = deep_reg_forward(x, w1, b1, w2, b2)
    jax.block_until_ready(out)
    ref = _xla_forward(x, w1, b1, w2, b2)
    assert out.shape == ref.shape == (B,)
    assert jnp.allclose(out, ref, atol=1e-5, rtol=1e-5)

    # 2) Multi-tile Pallas grid with a partial last block (B=300, tile 128 -> 3
    #    grid steps), feature-major entry point (no transpose pass).
    B2 = 300
    x2 = jax.random.normal(k_x2, (B2, IN), jnp.float32)
    out2 = deep_reg_forward_fm(x2.T, w1, b1, w2, b2, tile_b=128)
    jax.block_until_ready(out2)
    ref2 = _xla_forward(x2, w1, b1, w2, b2)
    assert out2.shape == ref2.shape == (B2,)
    assert jnp.allclose(out2, ref2, atol=2e-2, rtol=2e-2)   # bf16 layer-1 matmul

    # 3) Larger batch through the public wrapper (Pallas path, default tile logic,
    #    >=2 parallel grid steps).
    B3 = 4096
    x3 = jax.random.normal(k_x3, (B3, IN), jnp.float32)
    out3 = deep_reg_forward(x3, w1, b1, w2, b2)
    jax.block_until_ready(out3)
    ref3 = _xla_forward(x3, w1, b1, w2, b2)
    assert out3.shape == ref3.shape == (B3,)
    assert jnp.allclose(out3, ref3, atol=2e-2, rtol=2e-2)

    print("KERNEL_OK")
</pallas_src>

<mosaic_0001>
module attributes {stable_mosaic.version = 11 : i64} {
  func.func @_mlp_kernel(%arg0: i32, %arg1: memref<4x128xf32, #tpu.memory_space<vmem>>, %arg2: memref<64x4xbf16, #tpu.memory_space<vmem>>, %arg3: memref<64x1xf32, #tpu.memory_space<vmem>>, %arg4: memref<64x1xf32, #tpu.memory_space<vmem>>, %arg5: memref<1x1xf32, #tpu.memory_space<vmem>>, %arg6: memref<1x128xf32, #tpu.memory_space<vmem>>) attributes {dimension_semantics = [#tpu.dimension_semantics<parallel>], iteration_bounds = array<i64: 3>, scalar_prefetch = 0 : i64, scratch_operands = 0 : i64, tpu.core_type = #tpu.core_type<tc>, window_params = [{transform_indices = @transform_0, window_bounds = array<i64: 4, 128>}, {pipeline_mode = #tpu.pipeline_mode<synchronous>, transform_indices = @transform_1, window_bounds = array<i64: 64, 4>}, {pipeline_mode = #tpu.pipeline_mode<synchronous>, transform_indices = @transform_2, window_bounds = array<i64: 64, 1>}, {pipeline_mode = #tpu.pipeline_mode<synchronous>, transform_indices = @transform_3, window_bounds = array<i64: 64, 1>}, {pipeline_mode = #tpu.pipeline_mode<synchronous>, transform_indices = @transform_4, window_bounds = array<i64: 1, 1>}, {transform_indices = @transform_5, window_bounds = array<i64: 1, 128>}]} {
    %c0 = arith.constant 0 : index
    %c0_0 = arith.constant 0 : index
    %0 = vector.load %arg1[%c0, %c0_0] : memref<4x128xf32, #tpu.memory_space<vmem>>, vector<4x128xf32>
    %1 = arith.truncf %0 : vector<4x128xf32> to vector<4x128xbf16>
    %c0_1 = arith.constant 0 : index
    %c0_2 = arith.constant 0 : index
    %2 = vector.load %arg2[%c0_1, %c0_2] : memref<64x4xbf16, #tpu.memory_space<vmem>>, vector<64x4xbf16>
    %cst = arith.constant dense<0.000000e+00> : vector<64x128xf32>
    %3 = tpu.matmul %2, %1, %cst {dimension_numbers = #tpu.dot_dimension_numbers<[1], [0], [0], [1], [0, 0, 1, 1], [], []>} : vector<64x4xbf16>, vector<4x128xbf16>, vector<64x128xf32> -> vector<64x128xf32>
    %c0_3 = arith.constant 0 : index
    %c0_4 = arith.constant 0 : index
    %4 = vector.load %arg3[%c0_3, %c0_4] : memref<64x1xf32, #tpu.memory_space<vmem>>, vector<64x1xf32>
    %5 = vector.broadcast %4 : vector<64x1xf32> to vector<64x128xf32>
    %6 = arith.addf %3, %5 : vector<64x128xf32>
    %cst_5 = arith.constant 0.000000e+00 : f32
    %7 = vector.broadcast %cst_5 : f32 to vector<64x128xf32>
    %8 = arith.maximumf %6, %7 : vector<64x128xf32>
    %c0_6 = arith.constant 0 : index
    %c0_7 = arith.constant 0 : index
    %9 = vector.load %arg4[%c0_6, %c0_7] : memref<64x1xf32, #tpu.memory_space<vmem>>, vector<64x1xf32>
    %10 = vector.broadcast %9 : vector<64x1xf32> to vector<64x128xf32>
    %11 = arith.mulf %8, %10 : vector<64x128xf32>
    %cst_8 = arith.constant dense<0.000000e+00> : vector<128xf32>
    %12 = vector.multi_reduction <add>, %11, %cst_8 [0] : vector<64x128xf32> to vector<128xf32>
    %13 = vector.shape_cast %12 : vector<128xf32> to vector<1x128xf32>
    %c0_9 = arith.constant 0 : index
    %c0_10 = arith.constant 0 : index
    %14 = vector.load %arg5[%c0_9, %c0_10] : memref<1x1xf32, #tpu.memory_space<vmem>>, vector<1x1xf32>
    %15 = vector.broadcast %14 : vector<1x1xf32> to vector<1x128xf32>
    %16 = arith.addf %13, %15 : vector<1x128xf32>
    %c0_11 = arith.constant 0 : index
    %c0_12 = arith.constant 0 : index
    %17 = vector.load %arg6[%c0_11, %c0_12] : memref<1x128xf32, #tpu.memory_space<vmem>>, vector<1x128xf32>
    tpu.vector_store %arg6[%c0_11, %c0_12], %16 {strides = array<i32>} : memref<1x128xf32, #tpu.memory_space<vmem>>, vector<1x128xf32>,
    return
  }
  func.func @transform_0(%arg0: i32) -> (i32, i32) {
    %c0_i32 = arith.constant 0 : i32
    %c0_i32_0 = arith.constant 0 : i32
    return %c0_i32, %arg0 : i32, i32
  }
  func.func @transform_1(%arg0: i32) -> (i32, i32) {
    %c0_i32 = arith.constant 0 : i32
    %c0_i32_0 = arith.constant 0 : i32
    %c0_i32_1 = arith.constant 0 : i32
    return %c0_i32, %c0_i32_0 : i32, i32
  }
  func.func @transform_2(%arg0: i32) -> (i32, i32) {
    %c0_i32 = arith.constant 0 : i32
    %c0_i32_0 = arith.constant 0 : i32
    %c0_i32_1 = arith.constant 0 : i32
    return %c0_i32, %c0_i32_0 : i32, i32
  }
  func.func @transform_3(%arg0: i32) -> (i32, i32) {
    %c0_i32 = arith.constant 0 : i32
    %c0_i32_0 = arith.constant 0 : i32
    %c0_i32_1 = arith.constant 0 : i32
    return %c0_i32, %c0_i32_0 : i32, i32
  }
  func.func @transform_4(%arg0: i32) -> (i32, i32) {
    %c0_i32 = arith.constant 0 : i32
    %c0_i32_0 = arith.constant 0 : i32
    %c0_i32_1 = arith.constant 0 : i32
    return %c0_i32, %c0_i32_0 : i32, i32
  }
  func.func @transform_5(%arg0: i32) -> (i32, i32) {
    %c0_i32 = arith.constant 0 : i32
    %c0_i32_0 = arith.constant 0 : i32
    return %c0_i32, %arg0 : i32, i32
  }
}

</mosaic_0001>

<llo_original>
// kernel: _pallas_forward_fm.1
$region0: #{_pallas_forward_fm.1}
  #allocation0 [shape = 'u32[]', space=smem, size = 0x4, offset = 0x4, fixed_abs, tag = 'smem constant byte address 0x4 - core index']
  #allocation1 [shape = 'u32[144,128]{1,0:T(1,128)}', space=vmem, size = 0x12000, scoped, tag = 'internal scratch']
  #allocation2 [shape = 'f32[1,1]{1,0:T(1,128)S(1)}', space=vmem, size = 0x200, scoped, tag = 'scoped memory for _pallas_forward_fm.1']
  %s0 = inlined_call_operand.vmem [shape: f32[4,300], index: 0, kind: input, shape index: {}]
  %s1 = inlined_call_operand.vmem [shape: bf16[64,4], index: 1, kind: input, shape index: {}]
  %s2 = inlined_call_operand.vmem [shape: f32[64,1], index: 2, kind: input, shape index: {}]
  %s3 = inlined_call_operand.vmem [shape: f32[64,1], index: 3, kind: input, shape index: {}]
  %s4 = inlined_call_operand.<no memory space> [shape: f32[1,1], index: 4, kind: input, shape index: {}]
  %s5 = inlined_call_operand.hbm [shape: f32[1,300], index: 5, kind: output, shape index: {}]
  %s6 = sld [smem:[#allocation0]]
  $region53: #{_pallas_forward_fm.1} parent=0
    _
  %s8 = ssub.s32 1, %s6
  %s9 = scalar_select 0, %s8, %s6
  %v10 = vstv %s4
  %11 = vst [vmem:[#allocation2] sm:$0x1] %v10
  $region1: #{_pallas_forward_fm.1} parent=0
    #allocation3 [shape = 'u8[1024]{0}', space=vmem, size = 0x400, scoped, tag = 'output window, operand 0']
    #allocation4 [shape = 's32[2]{0}', space=sflag, size = 0x8, scoped, tag = 'scoped memory for _pallas_forward_fm.1']
    %12 = vsyncpa [#allocation4], 0
    %s13 = scalar_lea.sflag [#allocation4], 1
    %14 = vsyncpa %s13, 0
    loop: start=0, step=1, limit=5
    $region2: #{_pallas_forward_fm.1} parent=1 // loop_pre_header
      _
    $region3: #{_pallas_forward_fm.1} parent=1 // loop_header
      %s16 = sphi 0, %s20
      %p17 = scmp.ge.s32.totalorder %s16, 5
      %s26 = sphi 0, %s28
      %s29 = sphi 0, %s26
      %s30 = sphi 0, %s29
      %s46 = sphi 0, %s30
      %s50 = sphi 0, %s50
      %s52 = sphi 0, %s50
      %s53 = sphi 0, %s52
      %s67 = sphi 0, %s53
      %s71 = sphi 0, %s71
      %s73 = sphi 0, %s71
      %s74 = sphi 0, %s73
      %s88 = sphi 0, %s74
      %s92 = sphi 0, %s92
      %s94 = sphi 0, %s92
      %s95 = sphi 0, %s94
      %s109 = sphi 0, %s95
      %s113 = sphi 0, %s113
      %s115 = sphi 0, %s113
      %s116 = sphi 0, %s115
      %s130 = sphi 0, %s116
      %s136 = sphi 0, %s138
      %s139 = sphi 0, %s136
      %s140 = sphi 0, %s139
      %s156 = sphi 0, %s140
    $region4: #{_pallas_forward_fm.1} parent=1 // loop_header_branch
      %19 = sbr.rel (%p17) target = $region8
    $region5: #{_pallas_forward_fm.1} parent=1 // loop_body
      %s21 = ssub.s32 %s16, 1
      %s22 = ssub.s32 %s16, 2
      %s23 = sadd.s32 %s16, 1
      %s24 = ssub.s32 %s16, %s23
      %p25 = scmp.eq.s32.totalorder %s24, 0
      %s27 = sadd.s32 %s26, 1
      %s28 = scalar_select %p25, %s26, %s27
      %p31 = pneg %p25
      %p32 = scmp.eq.s32.totalorder %s16, 2
      %p33 = por %p31, %p32
      %p34 = scmp.ne.s32.totalorder %s26, %s29
      %p35 = scmp.eq.s32.totalorder %s16, 0
      %p36 = por %p34, %p35
      %p37 = scmp.ne.s32.totalorder %s26, %s29
      %p38 = scmp.eq.s32.totalorder %s21, 2
      %p39 = por %p37, %p38
      %p40 = scmp.ne.s32.totalorder %s29, %s30
      %p41 = scmp.eq.s32.totalorder %s21, 0
      %p42 = por %p40, %p41
      %p43 = scmp.ne.s32.totalorder %s29, %s30
      %p44 = scmp.eq.s32.totalorder %s22, 2
      %p45 = por %p43, %p44
      %p47 = scmp.ne.s32.totalorder %s30, %s46
      %p48 = scmp.eq.s32.totalorder %s22, 0
      %p49 = por %p47, %p48
      %s51 = sadd.s32 %s50, 1
      %p54 = scmp.eq.s32.totalorder %s16, 2
      %p55 = scmp.ne.s32.totalorder %s50, %s52
      %p56 = scmp.eq.s32.totalorder %s16, 0
      %p57 = por %p55, %p56
      %p58 = scmp.ne.s32.totalorder %s50, %s52
      %p59 = scmp.eq.s32.totalorder %s21, 2
      %p60 = por %p58, %p59
      %p61 = scmp.ne.s32.totalorder %s52, %s53
      %p62 = scmp.eq.s32.totalorder %s21, 0
      %p63 = por %p61, %p62
      %p64 = scmp.ne.s32.totalorder %s52, %s53
      %p65 = scmp.eq.s32.totalorder %s22, 2
      %p66 = por %p64, %p65
      %p68 = scmp.ne.s32.totalorder %s53, %s67
      %p69 = scmp.eq.s32.totalorder %s22, 0
      %p70 = por %p68, %p69
      %s72 = sadd.s32 %s71, 1
      %p75 = scmp.eq.s32.totalorder %s16, 2
      %p76 = scmp.ne.s32.totalorder %s71, %s73
      %p77 = scmp.eq.s32.totalorder %s16, 0
      %p78 = por %p76, %p77
      %p79 = scmp.ne.s32.totalorder %s71, %s73
      %p80 = scmp.eq.s32.totalorder %s21, 2
      %p81 = por %p79, %p80
      %p82 = scmp.ne.s32.totalorder %s73, %s74
      %p83 = scmp.eq.s32.totalorder %s21, 0
      %p84 = por %p82, %p83
      %p85 = scmp.ne.s32.totalorder %s73, %s74
      %p86 = scmp.eq.s32.totalorder %s22, 2
      %p87 = por %p85, %p86
      %p89 = scmp.ne.s32.totalorder %s74, %s88
      %p90 = scmp.eq.s32.totalorder %s22, 0
      %p91 = por %p89, %p90
      %s93 = sadd.s32 %s92, 1
      %p96 = scmp.eq.s32.totalorder %s16, 2
      %p97 = scmp.ne.s32.totalorder %s92, %s94
      %p98 = scmp.eq.s32.totalorder %s16, 0
      %p99 = por %p97, %p98
      %p100 = scmp.ne.s32.totalorder %s92, %s94
      %p101 = scmp.eq.s32.totalorder %s21, 2
      %p102 = por %p100, %p101
      %p103 = scmp.ne.s32.totalorder %s94, %s95
      %p104 = scmp.eq.s32.totalorder %s21, 0
      %p105 = por %p103, %p104
      %p106 = scmp.ne.s32.totalorder %s94, %s95
      %p107 = scmp.eq.s32.totalorder %s22, 2
      %p108 = por %p106, %p107
      %p110 = scmp.ne.s32.totalorder %s95, %s109
      %p111 = scmp.eq.s32.totalorder %s22, 0
      %p112 = por %p110, %p111
      %s114 = sadd.s32 %s113, 1
      %p117 = scmp.eq.s32.totalorder %s16, 2
      %p118 = scmp.ne.s32.totalorder %s113, %s115
      %p119 = scmp.eq.s32.totalorder %s16, 0
      %p120 = por %p118, %p119
      %p121 = scmp.ne.s32.totalorder %s113, %s115
      %p122 = scmp.eq.s32.totalorder %s21, 2
      %p123 = por %p121, %p122
      %p124 = scmp.ne.s32.totalorder %s115, %s116
      %p125 = scmp.eq.s32.totalorder %s21, 0
      %p126 = por %p124, %p125
      %p127 = scmp.ne.s32.totalorder %s115, %s116
      %p128 = scmp.eq.s32.totalorder %s22, 2
      %p129 = por %p127, %p128
      %p131 = scmp.ne.s32.totalorder %s116, %s130
      %p132 = scmp.eq.s32.totalorder %s22, 0
      %p133 = por %p131, %p132
      %s134 = ssub.s32 %s16, %s23
      %p135 = scmp.eq.s32.totalorder %s134, 0
      %s137 = sadd.s32 %s136, 1
      %s138 = scalar_select %p135, %s136, %s137
      %p141 = pneg %p135
      %p142 = scmp.eq.s32.totalorder %s16, 2
      %p143 = por %p141, %p142
      %p144 = scmp.ne.s32.totalorder %s136, %s139
      %p145 = scmp.eq.s32.totalorder %s16, 0
      %p146 = por %p144, %p145
      %p147 = scmp.ne.s32.totalorder %s136, %s139
      %p148 = scmp.eq.s32.totalorder %s21, 2
      %p149 = por %p147, %p148
      %p150 = scmp.ne.s32.totalorder %s139, %s140
      %p151 = scmp.eq.s32.totalorder %s21, 0
      %p152 = por %p150, %p151
      %p153 = scmp.ne.s32.totalorder %s139, %s140
      %p154 = scmp.eq.s32.totalorder %s22, 2
      %p155 = por %p153, %p154
      %p157 = scmp.ne.s32.totalorder %s140, %s156
      %p158 = scmp.eq.s32.totalorder %s22, 0
      %p159 = por %p157, %p158
      %p160 = scmp.le.s32.totalorder 1, %s16
      %p161 = scmp.lt.s32.totalorder %s16, 4
      %p162 = pnand %p160, %p161
      %p163 = pneg %p162
      // Predicated region
      $region9: #{_pallas_forward_fm.1} parent=5 // pred_check
        _
      $region10: #{_pallas_forward_fm.1} parent=5 // pred_check_branch
        %165 = sbr.rel (%p162) target = $region12
      $region11: #{_pallas_forward_fm.1} parent=5 // pred_region
        %s166 = ssub.s32 %s16, 1
        // Predicated region
        $region13: #{_pallas_forward_fm.1} parent=11 // pred_check
          %p167 = pneg %p63
        $region14: #{_pallas_forward_fm.1} parent=11 // pred_check_branch
          %169 = sbr.rel (%p167) target = $region16
        $region15: #{_pallas_forward_fm.1} parent=11 // pred_region
          _
        $region16: #{_pallas_forward_fm.1} parent=11 // pred_fallthru
          _
        // Predicated region
        $region17: #{_pallas_forward_fm.1} parent=11 // pred_check
          %p170 = pneg %p84
        $region18: #{_pallas_forward_fm.1} parent=11 // pred_check_branch
          %172 = sbr.rel (%p170) target = $region20
        $region19: #{_pallas_forward_fm.1} parent=11 // pred_region
          _
        $region20: #{_pallas_forward_fm.1} parent=11 // pred_fallthru
          _
        // Predicated region
        $region21: #{_pallas_forward_fm.1} parent=11 // pred_check
          %p173 = pneg %p105
        $region22: #{_pallas_forward_fm.1} parent=11 // pred_check_branch
          %175 = sbr.rel (%p173) target = $region24
        $region23: #{_pallas_forward_fm.1} parent=11 // pred_region
          _
        $region24: #{_pallas_forward_fm.1} parent=11 // pred_fallthru
          _
        // Predicated region
        $region25: #{_pallas_forward_fm.1} parent=11 // pred_check
          %p176 = pneg %p126
        $region26: #{_pallas_forward_fm.1} parent=11 // pred_check_branch
          %178 = sbr.rel (%p176) target = $region28
        $region27: #{_pallas_forward_fm.1} parent=11 // pred_region
          _
        $region28: #{_pallas_forward_fm.1} parent=11 // pred_fallthru
          _
      $region12: #{_pallas_forward_fm.1} parent=5 // pred_fallthru
        _
      %p179 = scmp.lt.s32.totalorder %s16, 3
      // Predicated region
      $region29: #{_pallas_forward_fm.1} parent=5 // pred_check
        %p180 = pneg %p179
      $region30: #{_pallas_forward_fm.1} parent=5 // pred_check_branch
        %182 = sbr.rel (%p180) target = $region32
      $region31: #{_pallas_forward_fm.1} parent=5 // pred_region
        // Predicated region
        $region33: #{_pallas_forward_fm.1} parent=31 // pred_check
          %p183 = pneg %p36
        $region34: #{_pallas_forward_fm.1} parent=31 // pred_check_branch
          %185 = sbr.rel (%p183) target = $region36
        $region35: #{_pallas_forward_fm.1} parent=31 // pred_region
          %p186 = scmp.lt.s32.totalorder %s16, 2
          %s187 = scalar_select %p186, %s16, 2
          %s188 = smul.addr %s187, 4
          %s189 = scalar_lea.vmem %s0, %s188
        $region36: #{_pallas_forward_fm.1} parent=31 // pred_fallthru
          _
      $region32: #{_pallas_forward_fm.1} parent=5 // pred_fallthru
        _
      %p190 = scmp.le.s32.totalorder 1, %s16
      %p191 = scmp.lt.s32.totalorder %s16, 4
      %p192 = pnand %p190, %p191
      %p193 = pneg %p192
      // Predicated region
      $region37: #{_pallas_forward_fm.1} parent=5 // pred_check
        _
      $region38: #{_pallas_forward_fm.1} parent=5 // pred_check_branch
        %195 = sbr.rel (%p192) target = $region40
      $region39: #{_pallas_forward_fm.1} parent=5 // pred_region
        %s196 = ssub.s32 %s16, 1
        %p197 = scmp.lt.s32.totalorder %s21, 2
        %s198 = scalar_select %p197, %s21, 2
        %s199 = smul.addr %s198, 4
        %s200 = scalar_lea.vmem %s0, %s199
        %p201 = pneg %p42
        %p202 = pneg %p39
        %p203 = pneg %p63
        %p204 = pneg %p60
        %p205 = pneg %p84
        %p206 = pneg %p81
        %p207 = pneg %p105
        %p208 = pneg %p102
        %p209 = pneg %p126
        %p210 = pneg %p123
        %p211 = pneg %p152
        %p212 = pneg %p149
        %s213 = sand.u32 %s139, 1
        %s214 = scalar_lea.sflag [#allocation4], %s213
        %s215 = sand.u32 %s139, 1
        %s216 = scalar_lea.vmem [#allocation3], %s215
        %p217 = scmp.lt.s32.totalorder %s21, 2
        %s218 = scalar_select %p217, %s21, 2
        %s219 = smul.addr %s218, 4
        %s220 = scalar_lea.vmem %s0, %s219
        %v222 = vld [vmem:[%s220] sm:$0xf]
        %v223 = vpack.c.bf16 %v222, %v222
        %v224 = vld [vmem:[%s1] sm:$0xf]
        %v225 = vld [vmem:[%s1 + $0x4] sm:$0xf]
        %v226 = vld [vmem:[%s1 + $0x8] sm:$0xf]
        %v227 = vld [vmem:[%s1 + $0xc] sm:$0xf]
        %v228 = vld [vmem:[%s1 + $0x10] sm:$0xf]
        %v229 = vld [vmem:[%s1 + $0x14] sm:$0xf]
        %v230 = vld [vmem:[%s1 + $0x18] sm:$0xf]
        %v231 = vld [vmem:[%s1 + $0x1c] sm:$0xf]
        %v232 = vld [vmem:[%s2] sm:$0xff]
        %v233 = vld [vmem:[%s2 + $0x8] sm:$0xff]
        %v234 = vld [vmem:[%s2 + $0x10] sm:$0xff]
        %v235 = vld [vmem:[%s2 + $0x18] sm:$0xff]
        %v236 = vld [vmem:[%s2 + $0x20] sm:$0xff]
        %v237 = vld [vmem:[%s2 + $0x28] sm:$0xff]
        %v238 = vld [vmem:[%s2 + $0x30] sm:$0xff]
        %v239 = vld [vmem:[%s2 + $0x38] sm:$0xff]
        %241 = vset.pattern.permute.xlu0 0
        %242 = vperm.xlu0 %241, %v232
        %v243 = vpop.permute.xlu0 %242
        %246 = vset.pattern.permute.xlu0 0
        %247 = vperm.xlu0 %246, %v233
        %v248 = vpop.permute.xlu0 %247
        %251 = vset.pattern.permute.xlu0 0
        %252 = vperm.xlu0 %251, %v234
        %v253 = vpop.permute.xlu0 %252
        %256 = vset.pattern.permute.xlu0 0
        %257 = vperm.xlu0 %256, %v235
        %v258 = vpop.permute.xlu0 %257
        %261 = vset.pattern.permute.xlu0 0
        %262 = vperm.xlu0 %261, %v236
        %v263 = vpop.permute.xlu0 %262
        %266 = vset.pattern.permute.xlu0 0
        %267 = vperm.xlu0 %266, %v237
        %v268 = vpop.permute.xlu0 %267
        %271 = vset.pattern.permute.xlu0 0
        %272 = vperm.xlu0 %271, %v238
        %v273 = vpop.permute.xlu0 %272
        %276 = vset.pattern.permute.xlu0 0
        %277 = vperm.xlu0 %276, %v239
        %v278 = vpop.permute.xlu0 %277
        %v288 = vunpack.c.l.b16 %v224
        %v289 = vunpack.c.l.b16 %v225
        %v290 = vunpack.c.l.b16 %v226
        %v291 = vunpack.c.l.b16 %v227
        %v292 = vunpack.c.l.b16 %v228
        %v293 = vunpack.c.l.b16 %v229
        %v294 = vunpack.c.l.b16 %v230
        %v295 = vunpack.c.l.b16 %v231
        %v296 = vpack.c.b16 %v289, %v288
        %v297 = vpack.c.b16 %v291, %v290
        %v298 = vpack.c.b16 %v293, %v292
        %v299 = vpack.c.b16 %v295, %v294
        %vm300 = vcmask 31744
        %v302 = vsel %vm300, %v296, 0
        %v305 = vsel %vm300, %v297, 0
        %v308 = vsel %vm300, %v298, 0
        %v311 = vsel %vm300, %v299, 0
        %vm313 = vcmask 1041408
        %v315 = vsel %vm313, %v223, 0
        %317 = vmatprep.subr.bf16.mxu0 0
        %318 = vmatpush1.bf16.msra.mxu0 0
        %319 = vmatprep.subr.bf16.mxu0 0
        %320 = vmatpush1.bf16.msra.mxu0 0
        %321 = vmatprep.subr.bf16.mxu0 0
        %322 = vmatpush1.bf16.msra.mxu0 0
        %323 = vmatprep.subr.bf16.mxu0 0
        %324 = vmatpush1.bf16.msra.mxu0 0
        %325 = vmatprep.subr.bf16.mxu0 0
        %326 = vmatpush1.bf16.msra.mxu0 0
        %327 = vmatprep.subr.bf16.mxu0 0
        %328 = vmatpush1.bf16.msra.mxu0 0
        %329 = vmatprep.subr.bf16.mxu0 0
        %330 = vmatpush1.bf16.msra.mxu0 0
        %331 = vmatprep.subr.bf16.mxu0 0
        %332 = vmatpush1.bf16.msra.mxu0 %v315
        %333 = vmatprep.subr.bf16.mxu0 0
        %334 = vmatpush2.bf16.msra.mxu0 0
        %335 = vmatprep.subr.bf16.mxu0 0
        %336 = vmatpush2.bf16.msra.mxu0 0
        %337 = vmatprep.subr.bf16.mxu0 0
        %338 = vmatpush2.bf16.msra.mxu0 0
        %339 = vmatprep.subr.bf16.mxu0 0
        %340 = vmatpush2.bf16.msra.mxu0 0
        %341 = vmatprep.subr.bf16.mxu0 0
        %342 = vmatpush2.bf16.msra.mxu0 0
        %343 = vmatprep.subr.bf16.mxu0 0
        %344 = vmatpush2.bf16.msra.mxu0 0
        %345 = vmatprep.subr.bf16.mxu0 0
        %346 = vmatpush2.bf16.msra.mxu0 0
        %347 = vmatprep.subr.bf16.mxu0 0
        %348 = vmatpush2.bf16.msra.mxu0 0
        %349 = vmatprep.mubr.bf16.mxu0 0
        %350 = vmatmul.mubr.bf16.gmra.mxu0 %v302
        %v351 = vpop.f32.mrf.mxu0
        %v352 = vadd.f32 %v243, %v351
        %v353 = vpop.f32.mrf.mxu0
        %v354 = vpop.f32.mrf.mxu0
        %v355 = vadd.f32 %v248, %v354
        %v356 = vpop.f32.mrf.mxu0
        %357 = vmatprep.mubr.bf16.mxu0 0
        %358 = vmatmul.mubr.bf16.gmra.mxu0 %v305
        %v359 = vpop.f32.mrf.mxu0
        %v360 = vadd.f32 %v253, %v359
        %v361 = vpop.f32.mrf.mxu0
        %v362 = vpop.f32.mrf.mxu0
        %v363 = vadd.f32 %v258, %v362
        %v364 = vpop.f32.mrf.mxu0
        %365 = vmatprep.mubr.bf16.mxu0 0
        %366 = vmatmul.mubr.bf16.gmra.mxu0 %v308
        %v367 = vpop.f32.mrf.mxu0
        %v368 = vadd.f32 %v263, %v367
        %v369 = vpop.f32.mrf.mxu0
        %v370 = vpop.f32.mrf.mxu0
        %v371 = vadd.f32 %v268, %v370
        %v372 = vpop.f32.mrf.mxu0
        %373 = vmatprep.mubr.bf16.mxu0 0
        %374 = vmatmul.mubr.bf16.gmra.mxu0 %v311
        %v375 = vpop.f32.mrf.mxu0
        %v376 = vadd.f32 %v273, %v375
        %v377 = vpop.f32.mrf.mxu0
        %v378 = vpop.f32.mrf.mxu0
        %v379 = vadd.f32 %v278, %v378
        %v380 = vpop.f32.mrf.mxu0
        %381 = vdwg.mxu0
        %v382 = vmax.f32 %v352, 0.0
        %v383 = vmax.f32 %v355, 0.0
        %v384 = vmax.f32 %v360, 0.0
        %v385 = vmax.f32 %v363, 0.0
        %v386 = vmax.f32 %v368, 0.0
        %v387 = vmax.f32 %v371, 0.0
        %v388 = vmax.f32 %v376, 0.0
        %v389 = vmax.f32 %v379, 0.0
        %v390 = vld [vmem:[%s3] sm:$0xff]
        %v391 = vld [vmem:[%s3 + $0x8] sm:$0xff]
        %v392 = vld [vmem:[%s3 + $0x10] sm:$0xff]
        %v393 = vld [vmem:[%s3 + $0x18] sm:$0xff]
        %v394 = vld [vmem:[%s3 + $0x20] sm:$0xff]
        %v395 = vld [vmem:[%s3 + $0x28] sm:$0xff]
        %v396 = vld [vmem:[%s3 + $0x30] sm:$0xff]
        %v397 = vld [vmem:[%s3 + $0x38] sm:$0xff]
        %399 = vset.pattern.permute.xlu0 0
        %400 = vperm.xlu0 %399, %v390
        %v401 = vpop.permute.xlu0 %400
        %404 = vset.pattern.permute.xlu0 0
        %405 = vperm.xlu0 %404, %v391
        %v406 = vpop.permute.xlu0 %405
        %409 = vset.pattern.permute.xlu0 0
        %410 = vperm.xlu0 %409, %v392
        %v411 = vpop.permute.xlu0 %410
        %414 = vset.pattern.permute.xlu0 0
        %415 = vperm.xlu0 %414, %v393
        %v416 = vpop.permute.xlu0 %415
        %419 = vset.pattern.permute.xlu0 0
        %420 = vperm.xlu0 %419, %v394
        %v421 = vpop.permute.xlu0 %420
        %424 = vset.pattern.permute.xlu0 0
        %425 = vperm.xlu0 %424, %v395
        %v426 = vpop.permute.xlu0 %425
        %429 = vset.pattern.permute.xlu0 0
        %430 = vperm.xlu0 %429, %v396
        %v431 = vpop.permute.xlu0 %430
        %434 = vset.pattern.permute.xlu0 0
        %435 = vperm.xlu0 %434, %v397
        %v436 = vpop.permute.xlu0 %435
        %v438 = vmul.f32 %v382, %v401
        %v439 = vmul.f32 %v383, %v406
        %v440 = vmul.f32 %v384, %v411
        %v441 = vmul.f32 %v385, %v416
        %v442 = vmul.f32 %v386, %v421
        %v443 = vmul.f32 %v387, %v426
        %v444 = vmul.f32 %v388, %v431
        %v445 = vmul.f32 %v389, %v436
        %v446 = vadd.f32 %v438, %v439
        %v447 = vadd.f32 %v446, %v440
        %v448 = vadd.f32 %v447, %v441
        %v449 = vadd.f32 %v448, %v442
        %v450 = vadd.f32 %v449, %v443
        %v451 = vadd.f32 %v450, %v444
        %v452 = vadd.f32 %v451, %v445
        %v453 = vrot.slane %v452, 4
        %v454 = vadd.f32 %v452, %v453
        %v455 = vrot.slane %v454, 2
        %v456 = vadd.f32 %v454, %v455
        %v457 = vrot.slane %v456, 1
        %v458 = vadd.f32 %v456, %v457
        %v459 = vld [vmem:[#allocation2] sm:$0x1]
        %461 = vset.pattern.permute.xlu0 0
        %462 = vperm.xlu0 %461, %v459
        %v463 = vpop.permute.xlu0 %462
        %v465 = vlaneseq
        %v466 = vshrl.u32 %v465, 7
        %v467 = vsub.s32 0, %v466
        %v468 = vrot.slane %v463, %v467
        %v469 = vadd.f32 %v458, %v468
        %470 = vst [vmem:[%s216] sm:$0x1] %v469
        %s471 = sand.u32 %s139, 1
        %s472 = scalar_lea.sflag [#allocation4], %s471
        %s473 = sand.u32 %s139, 1
        %s474 = scalar_lea.vmem [#allocation3], %s473
        // Predicated region
        $region41: #{_pallas_forward_fm.1} parent=39 // pred_check
          %p475 = pneg %p149
        $region42: #{_pallas_forward_fm.1} parent=39 // pred_check_branch
          %477 = sbr.rel (%p475) target = $region44
        $region43: #{_pallas_forward_fm.1} parent=39 // pred_region
          %s479 = ssub.s32 16, 16
          %480 = vsyncadd %s472, %s479
          %s481 = smul.addr %s21, 16
          %s482 = scalar_lea.hbm %s5, %s481
          %s484 = sshll.u32 %s474, 4
          %s485 = int_to_ptr.vmem [resolvable:$true] %s484
          %487 = dma.vmem_to_hbm [thread:$0]  %s485, 16, %s482, %s472
        $region44: #{_pallas_forward_fm.1} parent=39 // pred_fallthru
          _
      $region40: #{_pallas_forward_fm.1} parent=5 // pred_fallthru
        _
      %p488 = scmp.le.s32.totalorder 2, %s16
      // Predicated region
      $region45: #{_pallas_forward_fm.1} parent=5 // pred_check
        %p489 = pneg %p488
      $region46: #{_pallas_forward_fm.1} parent=5 // pred_check_branch
        %491 = sbr.rel (%p489) target = $region48
      $region47: #{_pallas_forward_fm.1} parent=5 // pred_region
        %s492 = ssub.s32 %s16, 2
        // Predicated region
        $region49: #{_pallas_forward_fm.1} parent=47 // pred_check
          %p493 = pneg %p155
        $region50: #{_pallas_forward_fm.1} parent=47 // pred_check_branch
          %495 = sbr.rel (%p493) target = $region52
        $region51: #{_pallas_forward_fm.1} parent=47 // pred_region
          %s496 = sand.u32 %s140, 1
          %s497 = scalar_lea.sflag [#allocation4], %s496
          %s498 = sand.u32 %s140, 1
          %s499 = scalar_lea.vmem [#allocation3], %s498
          %500 = dma.done %s497, 16
        $region52: #{_pallas_forward_fm.1} parent=47 // pred_fallthru
          _
      $region48: #{_pallas_forward_fm.1} parent=5 // pred_fallthru
        _
    $region6: #{_pallas_forward_fm.1} parent=1 // loop_footer
      %s20 = sadd.s32 1, %s16
    $region7: #{_pallas_forward_fm.1} parent=1 // loop_footer_branch
      %15 = sbr.rel target = $region3
    $region8: #{_pallas_forward_fm.1} parent=1 // loop_exit
      _
    %501 = vsyncpa [#allocation4], 1
    %s502 = scalar_lea.sflag [#allocation4], 1
    %503 = vsyncpa %s502, 1

</llo_original>
